<compile_context>
chip_gen: v6e
topology: v6e:2x2x1
jax: 0.10.0
libtpu: 0.0.40
codegen_flags: <defaults>
</compile_context>

<pallas_src>
import jax
import jax.numpy as jnp
from jax import lax
from jax.experimental import pallas as pl
from jax.experimental.pallas import tpu as pltpu

WEIGHT_ANGLE = 10.0
_NSUMS = 7
_LANES = 128
_SUBLANES = 8
_ROW_TILE = 512          # rows of 128 lanes per grid step (multiple of 8)
_NUM_CORE_SPLITS = 2     # leading "parallel" axis for v7x's 2 TensorCores


def _detection_loss_sums_kernel(gt_s_ref, pr_s_ref, gt_g_ref, pr_g_ref,
                                ign_ref, acc_ref):
    step = pl.program_id(1)

    @pl.when(step == 0)
    def _():
        # Each core's accumulator block is re-initialized at that core's
        # first inner step (the output block index only depends on axis 0).
        acc_ref[...] = jnp.zeros_like(acc_ref)

    gt_s = gt_s_ref[...].astype(jnp.float32)          # (tr, 128)
    pr_s = pr_s_ref[...].astype(jnp.float32)
    ign = ign_ref[...].astype(jnp.float32)
    # ignored_map is a {0,1} mask, so torch's `.byte()` truncation is a no-op.
    pr_s_masked = pr_s * (1.0 - ign)

    gt_g = gt_g_ref[...].astype(jnp.float32)          # (5, tr, 128)
    pr_g = pr_g_ref[...].astype(jnp.float32)
    d1_gt, d2_gt, d3_gt, d4_gt, angle_gt = [gt_g[i] for i in range(5)]
    d1_p, d2_p, d3_p, d4_p, angle_p = [pr_g[i] for i in range(5)]

    # ---- geo loss maps (per-pixel elementwise; VPU + EUP) ----
    area_gt = (d1_gt + d2_gt) * (d3_gt + d4_gt)
    area_pr = (d1_p + d2_p) * (d3_p + d4_p)
    w_union = jnp.minimum(d3_gt, d3_p) + jnp.minimum(d4_gt, d4_p)
    h_union = jnp.minimum(d1_gt, d1_p) + jnp.minimum(d2_gt, d2_p)
    area_int = w_union * h_union
    area_uni = area_gt + area_pr - area_int
    iou_loss_map = -jnp.log((area_int + 1.0) / (area_uni + 1.0))
    angle_loss_map = 1.0 - jnp.cos(angle_p - angle_gt)

    tr = gt_s.shape[0]
    nreg = tr // _SUBLANES

    def fold(x):
        # (tr, 128) -> (8, 128): elementwise adds over the leading vreg-index
        # axis only; no cross-sublane / cross-lane (XLU) work per step.
        return x.reshape(nreg, _SUBLANES, _LANES).sum(axis=0)

    acc_ref[0] += fold(gt_s)                    # sum(gt_score)
    acc_ref[1] += fold(pr_s_masked)             # sum(pred_score * (1 - ignored))
    acc_ref[2] += fold(gt_s * pr_s_masked)      # dice intersection
    acc_ref[3] += fold(angle_loss_map * gt_s)   # sum(angle_loss_map * gt_score)
    acc_ref[4] += fold(iou_loss_map * gt_s)     # sum(iou_loss_map * gt_score)
    acc_ref[5] += fold(pr_s)                    # sum(pred_score)   (degenerate branch)
    acc_ref[6] += pr_g.reshape(5 * nreg, _SUBLANES, _LANES).sum(axis=0)  # sum(pred_geo)


def detection_loss_sums(gt_score, pred_score, gt_geo, pred_geo, ignored_map,
                        *, input_dtype=jnp.bfloat16, row_tile=_ROW_TILE,
                        num_core_splits=_NUM_CORE_SPLITS):
    """Returns the 7 global sums needed by DetectionLoss as an f32[7] array."""
    N, _, H, W = gt_score.shape
    P = N * H * W

    # Lane/sublane-dense row count (multiple of 8 rows of 128 lanes).
    rows = -(-P // _LANES)
    rows = -(-rows // _SUBLANES) * _SUBLANES

    tr = min(row_tile, rows)
    tr = max(_SUBLANES, (tr // _SUBLANES) * _SUBLANES)

    tiles = -(-rows // tr)
    ncores = num_core_splits if tiles >= num_core_splits else 1
    tiles = -(-tiles // ncores) * ncores
    tiles_per_core = tiles // ncores
    rows_padded = tiles * tr
    pp = rows_padded * _LANES          # padded pixel count (zero padding is
                                       # exact: all padded contributions are 0)

    def flat_score(x):                 # (N,1,H,W) -> (rows_padded, 128)
        x = x.reshape(-1).astype(input_dtype)
        x = jnp.pad(x, (0, pp - P))
        return x.reshape(rows_padded, _LANES)

    def flat_geo(x):                   # (N,5,H,W) -> (5, rows_padded, 128)
        x = jnp.transpose(x, (1, 0, 2, 3)).reshape(5, -1).astype(input_dtype)
        x = jnp.pad(x, ((0, 0), (0, pp - P)))
        return x.reshape(5, rows_padded, _LANES)

    gs = flat_score(gt_score)
    ps = flat_score(pred_score)
    im = flat_score(ignored_map)
    gg = flat_geo(gt_geo)
    pg = flat_geo(pred_geo)

    score_spec = pl.BlockSpec((tr, _LANES),
                              lambda c, b: (c * tiles_per_core + b, 0))
    geo_spec = pl.BlockSpec((5, tr, _LANES),
                            lambda c, b: (0, c * tiles_per_core + b, 0))
    out_spec = pl.BlockSpec((_NSUMS, _SUBLANES, _LANES),
                            lambda c, b: (c, 0, 0))

    out = pl.pallas_call(
        _detection_loss_sums_kernel,
        out_shape=jax.ShapeDtypeStruct((ncores * _NSUMS, _SUBLANES, _LANES),
                                       jnp.float32),
        grid_spec=pltpu.PrefetchScalarGridSpec(
            num_scalar_prefetch=0,
            grid=(ncores, tiles_per_core),
            in_specs=[score_spec, score_spec, geo_spec, geo_spec, score_spec],
            out_specs=out_spec,
        ),
        compiler_params=pltpu.CompilerParams(
            dimension_semantics=("parallel", "arbitrary"),
            vmem_limit_bytes=32 * 1024 * 1024,
        ),
    )(gs, ps, gg, pg, im)

    # Final (tiny) cross-core / cross-sublane / cross-lane reduction.
    return out.reshape(ncores, _NSUMS, -1).sum(axis=(0, 2))


def detection_loss(gt_score, pred_score, gt_geo, pred_geo, ignored_map,
                   weight_angle=WEIGHT_ANGLE):
    """Full DetectionLoss.forward, jittable (epilogue stays on-device)."""
    sums = detection_loss_sums(gt_score, pred_score, gt_geo, pred_geo,
                               ignored_map)
    s_gt, s_pred_masked, inter, s_angle, s_iou, s_pred_score, s_pred_geo = (
        sums[0], sums[1], sums[2], sums[3], sums[4], sums[5], sums[6])

    def _degenerate(_):
        # torch.sum(pred_score + pred_geo): (N,1,H,W) broadcasts over 5 geo
        # channels -> 5*sum(pred_score) + sum(pred_geo).
        d = 5.0 * s_pred_score + s_pred_geo
        # NOTE: PyTorch returns a 2-tuple in this branch; we return a 3-tuple
        # (iou := 0) so both lax.cond branches share one structure.
        return d, d, jnp.float32(0.0)

    def _normal(_):
        union = s_gt + s_pred_masked + 1e-5
        classify_loss = 1.0 - 2.0 * inter / union
        iou = inter / union
        angle_loss = s_angle / s_gt
        iou_loss = s_iou / s_gt
        geo_loss = weight_angle * angle_loss + iou_loss
        # (the original's print() is dropped to keep this jittable)
        return geo_loss, classify_loss, iou

    return lax.cond(s_gt < 1.0, _degenerate, _normal, None)


def reference_detection_loss(gt_score, pred_score, gt_geo, pred_geo,
                             ignored_map, weight_angle=WEIGHT_ANGLE):
    """Pure-JAX f32 reference mirroring the PyTorch module."""
    gt_sum = jnp.sum(gt_score)
    degenerate = jnp.sum(pred_score + pred_geo)
    pred_masked = pred_score * (1.0 - ignored_map)
    inter = jnp.sum(gt_score * pred_masked)
    union = gt_sum + jnp.sum(pred_masked) + 1e-5
    classify_loss = 1.0 - 2.0 * inter / union
    iou = inter / union
    d1_gt, d2_gt, d3_gt, d4_gt, a_gt = jnp.split(gt_geo, 5, axis=1)
    d1_p, d2_p, d3_p, d4_p, a_p = jnp.split(pred_geo, 5, axis=1)
    area_gt = (d1_gt + d2_gt) * (d3_gt + d4_gt)
    area_pr = (d1_p + d2_p) * (d3_p + d4_p)
    w_u = jnp.minimum(d3_gt, d3_p) + jnp.minimum(d4_gt, d4_p)
    h_u = jnp.minimum(d1_gt, d1_p) + jnp.minimum(d2_gt, d2_p)
    area_i = w_u * h_u
    area_un = area_gt + area_pr - area_i
    iou_map = -jnp.log((area_i + 1.0) / (area_un + 1.0))
    angle_map = 1.0 - jnp.cos(a_p - a_gt)
    angle_loss = jnp.sum(angle_map * gt_score) / gt_sum
    iou_loss = jnp.sum(iou_map * gt_score) / gt_sum
    geo_loss = weight_angle * angle_loss + iou_loss
    if float(gt_sum) < 1.0:
        return degenerate, degenerate, jnp.float32(0.0)
    return geo_loss, classify_loss, iou


if __name__ == "__main__":
    import numpy as np

    key = jax.random.PRNGKey(0)
    k1, k2, k3, k4, k5 = jax.random.split(key, 5)

    N, H, W = 2, 16, 16
    gt_score = (jax.random.uniform(k1, (N, 1, H, W)) > 0.5).astype(jnp.float32)
    pred_score = jax.random.uniform(k2, (N, 1, H, W), dtype=jnp.float32)
    gt_geo = jax.random.uniform(k3, (N, 5, H, W), dtype=jnp.float32) * 10.0
    pred_geo = jax.random.uniform(k4, (N, 5, H, W), dtype=jnp.float32) * 10.0
    ignored_map = (jax.random.uniform(k5, (N, 1, H, W)) > 0.9).astype(jnp.float32)

    loss_fn = jax.jit(detection_loss)
    geo_loss, classify_loss, iou = loss_fn(gt_score, pred_score, gt_geo,
                                           pred_geo, ignored_map)
    jax.block_until_ready((geo_loss, classify_loss, iou))

    # Pure-JAX f32 reference; loose tolerance because kernel inputs are bf16
    # (accumulation stays f32).
    ref = reference_detection_loss(gt_score, pred_score, gt_geo, pred_geo,
                                   ignored_map)
    np.testing.assert_allclose(
        np.array([float(geo_loss), float(classify_loss), float(iou)]),
        np.array([float(ref[0]), float(ref[1]), float(ref[2])]),
        rtol=0.08, atol=0.05)

    assert all(bool(jnp.isfinite(v)) for v in (geo_loss, classify_loss, iou))
    print("KERNEL_OK")
</pallas_src>

<mosaic_0001>
module attributes {stable_mosaic.version = 11 : i64} {
  func.func @_detection_loss_sums_kernel(%arg0: i32, %arg1: i32, %arg2: memref<8x128xbf16, #tpu.memory_space<vmem>>, %arg3: memref<8x128xbf16, #tpu.memory_space<vmem>>, %arg4: memref<5x8x128xbf16, #tpu.memory_space<vmem>>, %arg5: memref<5x8x128xbf16, #tpu.memory_space<vmem>>, %arg6: memref<8x128xbf16, #tpu.memory_space<vmem>>, %arg7: memref<7x8x128xf32, #tpu.memory_space<vmem>>) attributes {dimension_semantics = [#tpu.dimension_semantics<parallel>, #tpu.dimension_semantics<arbitrary>], iteration_bounds = array<i64: 1, 1>, scalar_prefetch = 0 : i64, scratch_operands = 0 : i64, tpu.core_type = #tpu.core_type<tc>, window_params = [{transform_indices = @transform_0, window_bounds = array<i64: 8, 128>}, {transform_indices = @transform_1, window_bounds = array<i64: 8, 128>}, {transform_indices = @transform_2, window_bounds = array<i64: 5, 8, 128>}, {transform_indices = @transform_3, window_bounds = array<i64: 5, 8, 128>}, {transform_indices = @transform_4, window_bounds = array<i64: 8, 128>}, {transform_indices = @transform_5, window_bounds = array<i64: 7, 8, 128>}]} {
    %c0_i32 = arith.constant 0 : i32
    %0 = arith.cmpi eq, %arg1, %c0_i32 : i32
    %1 = arith.extui %0 : i1 to i32
    %c0_i32_0 = arith.constant 0 : i32
    %2 = arith.cmpi ne, %1, %c0_i32_0 : i32
    scf.if %2 {
      %cst_59 = arith.constant 0.000000e+00 : f32
      %121 = vector.broadcast %cst_59 : f32 to vector<7x8x128xf32>
      %c0_60 = arith.constant 0 : index
      %c0_61 = arith.constant 0 : index
      %c0_62 = arith.constant 0 : index
      %122 = vector.load %arg7[%c0_60, %c0_61, %c0_62] : memref<7x8x128xf32, #tpu.memory_space<vmem>>, vector<7x8x128xf32>
      tpu.vector_store %arg7[%c0_60, %c0_61, %c0_62], %121 {strides = array<i32>} : memref<7x8x128xf32, #tpu.memory_space<vmem>>, vector<7x8x128xf32>,
    } else {
    }
    %c0 = arith.constant 0 : index
    %c0_1 = arith.constant 0 : index
    %3 = vector.load %arg2[%c0, %c0_1] : memref<8x128xbf16, #tpu.memory_space<vmem>>, vector<8x128xbf16>
    %4 = arith.extf %3 : vector<8x128xbf16> to vector<8x128xf32>
    %c0_2 = arith.constant 0 : index
    %c0_3 = arith.constant 0 : index
    %5 = vector.load %arg3[%c0_2, %c0_3] : memref<8x128xbf16, #tpu.memory_space<vmem>>, vector<8x128xbf16>
    %6 = arith.extf %5 : vector<8x128xbf16> to vector<8x128xf32>
    %c0_4 = arith.constant 0 : index
    %c0_5 = arith.constant 0 : index
    %7 = vector.load %arg6[%c0_4, %c0_5] : memref<8x128xbf16, #tpu.memory_space<vmem>>, vector<8x128xbf16>
    %8 = arith.extf %7 : vector<8x128xbf16> to vector<8x128xf32>
    %cst = arith.constant 1.000000e+00 : f32
    %9 = vector.broadcast %cst : f32 to vector<8x128xf32>
    %10 = arith.subf %9, %8 : vector<8x128xf32>
    %11 = arith.mulf %6, %10 : vector<8x128xf32>
    %c0_6 = arith.constant 0 : index
    %c0_7 = arith.constant 0 : index
    %c0_8 = arith.constant 0 : index
    %12 = vector.load %arg4[%c0_6, %c0_7, %c0_8] : memref<5x8x128xbf16, #tpu.memory_space<vmem>>, vector<5x8x128xbf16>
    %13 = arith.extf %12 : vector<5x8x128xbf16> to vector<5x8x128xf32>
    %c0_9 = arith.constant 0 : index
    %c0_10 = arith.constant 0 : index
    %c0_11 = arith.constant 0 : index
    %14 = vector.load %arg5[%c0_9, %c0_10, %c0_11] : memref<5x8x128xbf16, #tpu.memory_space<vmem>>, vector<5x8x128xbf16>
    %15 = arith.extf %14 : vector<5x8x128xbf16> to vector<5x8x128xf32>
    %16 = vector.extract_strided_slice %13 {offsets = [0, 0, 0], sizes = [1, 8, 128], strides = [1, 1, 1]} : vector<5x8x128xf32> to vector<1x8x128xf32>
    %17 = vector.shape_cast %16 : vector<1x8x128xf32> to vector<8x128xf32>
    %18 = vector.extract_strided_slice %13 {offsets = [1, 0, 0], sizes = [1, 8, 128], strides = [1, 1, 1]} : vector<5x8x128xf32> to vector<1x8x128xf32>
    %19 = vector.shape_cast %18 : vector<1x8x128xf32> to vector<8x128xf32>
    %20 = vector.extract_strided_slice %13 {offsets = [2, 0, 0], sizes = [1, 8, 128], strides = [1, 1, 1]} : vector<5x8x128xf32> to vector<1x8x128xf32>
    %21 = vector.shape_cast %20 : vector<1x8x128xf32> to vector<8x128xf32>
    %22 = vector.extract_strided_slice %13 {offsets = [3, 0, 0], sizes = [1, 8, 128], strides = [1, 1, 1]} : vector<5x8x128xf32> to vector<1x8x128xf32>
    %23 = vector.shape_cast %22 : vector<1x8x128xf32> to vector<8x128xf32>
    %24 = vector.extract_strided_slice %13 {offsets = [4, 0, 0], sizes = [1, 8, 128], strides = [1, 1, 1]} : vector<5x8x128xf32> to vector<1x8x128xf32>
    %25 = vector.shape_cast %24 : vector<1x8x128xf32> to vector<8x128xf32>
    %26 = vector.extract_strided_slice %15 {offsets = [0, 0, 0], sizes = [1, 8, 128], strides = [1, 1, 1]} : vector<5x8x128xf32> to vector<1x8x128xf32>
    %27 = vector.shape_cast %26 : vector<1x8x128xf32> to vector<8x128xf32>
    %28 = vector.extract_strided_slice %15 {offsets = [1, 0, 0], sizes = [1, 8, 128], strides = [1, 1, 1]} : vector<5x8x128xf32> to vector<1x8x128xf32>
    %29 = vector.shape_cast %28 : vector<1x8x128xf32> to vector<8x128xf32>
    %30 = vector.extract_strided_slice %15 {offsets = [2, 0, 0], sizes = [1, 8, 128], strides = [1, 1, 1]} : vector<5x8x128xf32> to vector<1x8x128xf32>
    %31 = vector.shape_cast %30 : vector<1x8x128xf32> to vector<8x128xf32>
    %32 = vector.extract_strided_slice %15 {offsets = [3, 0, 0], sizes = [1, 8, 128], strides = [1, 1, 1]} : vector<5x8x128xf32> to vector<1x8x128xf32>
    %33 = vector.shape_cast %32 : vector<1x8x128xf32> to vector<8x128xf32>
    %34 = vector.extract_strided_slice %15 {offsets = [4, 0, 0], sizes = [1, 8, 128], strides = [1, 1, 1]} : vector<5x8x128xf32> to vector<1x8x128xf32>
    %35 = vector.shape_cast %34 : vector<1x8x128xf32> to vector<8x128xf32>
    %36 = arith.addf %17, %19 : vector<8x128xf32>
    %37 = arith.addf %21, %23 : vector<8x128xf32>
    %38 = arith.mulf %36, %37 : vector<8x128xf32>
    %39 = arith.addf %27, %29 : vector<8x128xf32>
    %40 = arith.addf %31, %33 : vector<8x128xf32>
    %41 = arith.mulf %39, %40 : vector<8x128xf32>
    %42 = arith.minimumf %21, %31 : vector<8x128xf32>
    %43 = arith.minimumf %23, %33 : vector<8x128xf32>
    %44 = arith.addf %42, %43 : vector<8x128xf32>
    %45 = arith.minimumf %17, %27 : vector<8x128xf32>
    %46 = arith.minimumf %19, %29 : vector<8x128xf32>
    %47 = arith.addf %45, %46 : vector<8x128xf32>
    %48 = arith.mulf %44, %47 : vector<8x128xf32>
    %49 = arith.addf %38, %41 : vector<8x128xf32>
    %50 = arith.subf %49, %48 : vector<8x128xf32>
    %cst_12 = arith.constant 1.000000e+00 : f32
    %51 = vector.broadcast %cst_12 : f32 to vector<8x128xf32>
    %52 = arith.addf %48, %51 : vector<8x128xf32>
    %cst_13 = arith.constant 1.000000e+00 : f32
    %53 = vector.broadcast %cst_13 : f32 to vector<8x128xf32>
    %54 = arith.addf %50, %53 : vector<8x128xf32>
    %55 = arith.divf %52, %54 : vector<8x128xf32>
    %56 = math.log %55 : vector<8x128xf32>
    %cst_14 = arith.constant 0.000000e+00 : f32
    %57 = vector.broadcast %cst_14 : f32 to vector<8x128xf32>
    %58 = arith.subf %57, %56 : vector<8x128xf32>
    %59 = arith.subf %35, %25 : vector<8x128xf32>
    %60 = math.cos %59 : vector<8x128xf32>
    %cst_15 = arith.constant 1.000000e+00 : f32
    %61 = vector.broadcast %cst_15 : f32 to vector<8x128xf32>
    %62 = arith.subf %61, %60 : vector<8x128xf32>
    %c0_16 = arith.constant 0 : index
    %c0_17 = arith.constant 0 : index
    %c0_18 = arith.constant 0 : index
    %63 = vector.load %arg7[%c0_16, %c0_17, %c0_18] : memref<7x8x128xf32, #tpu.memory_space<vmem>>, vector<1x8x128xf32>
    %64 = vector.shape_cast %63 : vector<1x8x128xf32> to vector<8x128xf32>
    %65 = vector.shape_cast %4 : vector<8x128xf32> to vector<1x8x128xf32>
    %cst_19 = arith.constant dense<0.000000e+00> : vector<8x128xf32>
    %66 = vector.multi_reduction <add>, %65, %cst_19 [0] : vector<1x8x128xf32> to vector<8x128xf32>
    %67 = arith.addf %64, %66 : vector<8x128xf32>
    %c0_20 = arith.constant 0 : index
    %c0_21 = arith.constant 0 : index
    %c0_22 = arith.constant 0 : index
    %68 = vector.load %arg7[%c0_20, %c0_21, %c0_22] : memref<7x8x128xf32, #tpu.memory_space<vmem>>, vector<1x8x128xf32>
    %69 = vector.shape_cast %68 : vector<1x8x128xf32> to vector<8x128xf32>
    %70 = vector.shape_cast %67 : vector<8x128xf32> to vector<1x8x128xf32>
    tpu.vector_store %arg7[%c0_20, %c0_21, %c0_22], %70 {strides = array<i32>} : memref<7x8x128xf32, #tpu.memory_space<vmem>>, vector<1x8x128xf32>,
    %c1 = arith.constant 1 : index
    %c0_23 = arith.constant 0 : index
    %c0_24 = arith.constant 0 : index
    %71 = vector.load %arg7[%c1, %c0_23, %c0_24] : memref<7x8x128xf32, #tpu.memory_space<vmem>>, vector<1x8x128xf32>
    %72 = vector.shape_cast %71 : vector<1x8x128xf32> to vector<8x128xf32>
    %73 = vector.shape_cast %11 : vector<8x128xf32> to vector<1x8x128xf32>
    %cst_25 = arith.constant dense<0.000000e+00> : vector<8x128xf32>
    %74 = vector.multi_reduction <add>, %73, %cst_25 [0] : vector<1x8x128xf32> to vector<8x128xf32>
    %75 = arith.addf %72, %74 : vector<8x128xf32>
    %c1_26 = arith.constant 1 : index
    %c0_27 = arith.constant 0 : index
    %c0_28 = arith.constant 0 : index
    %76 = vector.load %arg7[%c1_26, %c0_27, %c0_28] : memref<7x8x128xf32, #tpu.memory_space<vmem>>, vector<1x8x128xf32>
    %77 = vector.shape_cast %76 : vector<1x8x128xf32> to vector<8x128xf32>
    %78 = vector.shape_cast %75 : vector<8x128xf32> to vector<1x8x128xf32>
    tpu.vector_store %arg7[%c1_26, %c0_27, %c0_28], %78 {strides = array<i32>} : memref<7x8x128xf32, #tpu.memory_space<vmem>>, vector<1x8x128xf32>,
    %c2 = arith.constant 2 : index
    %c0_29 = arith.constant 0 : index
    %c0_30 = arith.constant 0 : index
    %79 = vector.load %arg7[%c2, %c0_29, %c0_30] : memref<7x8x128xf32, #tpu.memory_space<vmem>>, vector<1x8x128xf32>
    %80 = vector.shape_cast %79 : vector<1x8x128xf32> to vector<8x128xf32>
    %81 = arith.mulf %4, %11 : vector<8x128xf32>
    %82 = vector.shape_cast %81 : vector<8x128xf32> to vector<1x8x128xf32>
    %cst_31 = arith.constant dense<0.000000e+00> : vector<8x128xf32>
    %83 = vector.multi_reduction <add>, %82, %cst_31 [0] : vector<1x8x128xf32> to vector<8x128xf32>
    %84 = arith.addf %80, %83 : vector<8x128xf32>
    %c2_32 = arith.constant 2 : index
    %c0_33 = arith.constant 0 : index
    %c0_34 = arith.constant 0 : index
    %85 = vector.load %arg7[%c2_32, %c0_33, %c0_34] : memref<7x8x128xf32, #tpu.memory_space<vmem>>, vector<1x8x128xf32>
    %86 = vector.shape_cast %85 : vector<1x8x128xf32> to vector<8x128xf32>
    %87 = vector.shape_cast %84 : vector<8x128xf32> to vector<1x8x128xf32>
    tpu.vector_store %arg7[%c2_32, %c0_33, %c0_34], %87 {strides = array<i32>} : memref<7x8x128xf32, #tpu.memory_space<vmem>>, vector<1x8x128xf32>,
    %c3 = arith.constant 3 : index
    %c0_35 = arith.constant 0 : index
    %c0_36 = arith.constant 0 : index
    %88 = vector.load %arg7[%c3, %c0_35, %c0_36] : memref<7x8x128xf32, #tpu.memory_space<vmem>>, vector<1x8x128xf32>
    %89 = vector.shape_cast %88 : vector<1x8x128xf32> to vector<8x128xf32>
    %90 = arith.mulf %62, %4 : vector<8x128xf32>
    %91 = vector.shape_cast %90 : vector<8x128xf32> to vector<1x8x128xf32>
    %cst_37 = arith.constant dense<0.000000e+00> : vector<8x128xf32>
    %92 = vector.multi_reduction <add>, %91, %cst_37 [0] : vector<1x8x128xf32> to vector<8x128xf32>
    %93 = arith.addf %89, %92 : vector<8x128xf32>
    %c3_38 = arith.constant 3 : index
    %c0_39 = arith.constant 0 : index
    %c0_40 = arith.constant 0 : index
    %94 = vector.load %arg7[%c3_38, %c0_39, %c0_40] : memref<7x8x128xf32, #tpu.memory_space<vmem>>, vector<1x8x128xf32>
    %95 = vector.shape_cast %94 : vector<1x8x128xf32> to vector<8x128xf32>
    %96 = vector.shape_cast %93 : vector<8x128xf32> to vector<1x8x128xf32>
    tpu.vector_store %arg7[%c3_38, %c0_39, %c0_40], %96 {strides = array<i32>} : memref<7x8x128xf32, #tpu.memory_space<vmem>>, vector<1x8x128xf32>,
    %c4 = arith.constant 4 : index
    %c0_41 = arith.constant 0 : index
    %c0_42 = arith.constant 0 : index
    %97 = vector.load %arg7[%c4, %c0_41, %c0_42] : memref<7x8x128xf32, #tpu.memory_space<vmem>>, vector<1x8x128xf32>
    %98 = vector.shape_cast %97 : vector<1x8x128xf32> to vector<8x128xf32>
    %99 = arith.mulf %58, %4 : vector<8x128xf32>
    %100 = vector.shape_cast %99 : vector<8x128xf32> to vector<1x8x128xf32>
    %cst_43 = arith.constant dense<0.000000e+00> : vector<8x128xf32>
    %101 = vector.multi_reduction <add>, %100, %cst_43 [0] : vector<1x8x128xf32> to vector<8x128xf32>
    %102 = arith.addf %98, %101 : vector<8x128xf32>
    %c4_44 = arith.constant 4 : index
    %c0_45 = arith.constant 0 : index
    %c0_46 = arith.constant 0 : index
    %103 = vector.load %arg7[%c4_44, %c0_45, %c0_46] : memref<7x8x128xf32, #tpu.memory_space<vmem>>, vector<1x8x128xf32>
    %104 = vector.shape_cast %103 : vector<1x8x128xf32> to vector<8x128xf32>
    %105 = vector.shape_cast %102 : vector<8x128xf32> to vector<1x8x128xf32>
    tpu.vector_store %arg7[%c4_44, %c0_45, %c0_46], %105 {strides = array<i32>} : memref<7x8x128xf32, #tpu.memory_space<vmem>>, vector<1x8x128xf32>,
    %c5 = arith.constant 5 : index
    %c0_47 = arith.constant 0 : index
    %c0_48 = arith.constant 0 : index
    %106 = vector.load %arg7[%c5, %c0_47, %c0_48] : memref<7x8x128xf32, #tpu.memory_space<vmem>>, vector<1x8x128xf32>
    %107 = vector.shape_cast %106 : vector<1x8x128xf32> to vector<8x128xf32>
    %108 = vector.shape_cast %6 : vector<8x128xf32> to vector<1x8x128xf32>
    %cst_49 = arith.constant dense<0.000000e+00> : vector<8x128xf32>
    %109 = vector.multi_reduction <add>, %108, %cst_49 [0] : vector<1x8x128xf32> to vector<8x128xf32>
    %110 = arith.addf %107, %109 : vector<8x128xf32>
    %c5_50 = arith.constant 5 : index
    %c0_51 = arith.constant 0 : index
    %c0_52 = arith.constant 0 : index
    %111 = vector.load %arg7[%c5_50, %c0_51, %c0_52] : memref<7x8x128xf32, #tpu.memory_space<vmem>>, vector<1x8x128xf32>
    %112 = vector.shape_cast %111 : vector<1x8x128xf32> to vector<8x128xf32>
    %113 = vector.shape_cast %110 : vector<8x128xf32> to vector<1x8x128xf32>
    tpu.vector_store %arg7[%c5_50, %c0_51, %c0_52], %113 {strides = array<i32>} : memref<7x8x128xf32, #tpu.memory_space<vmem>>, vector<1x8x128xf32>,
    %c6 = arith.constant 6 : index
    %c0_53 = arith.constant 0 : index
    %c0_54 = arith.constant 0 : index
    %114 = vector.load %arg7[%c6, %c0_53, %c0_54] : memref<7x8x128xf32, #tpu.memory_space<vmem>>, vector<1x8x128xf32>
    %115 = vector.shape_cast %114 : vector<1x8x128xf32> to vector<8x128xf32>
    %cst_55 = arith.constant dense<0.000000e+00> : vector<8x128xf32>
    %116 = vector.multi_reduction <add>, %15, %cst_55 [0] : vector<5x8x128xf32> to vector<8x128xf32>
    %117 = arith.addf %115, %116 : vector<8x128xf32>
    %c6_56 = arith.constant 6 : index
    %c0_57 = arith.constant 0 : index
    %c0_58 = arith.constant 0 : index
    %118 = vector.load %arg7[%c6_56, %c0_57, %c0_58] : memref<7x8x128xf32, #tpu.memory_space<vmem>>, vector<1x8x128xf32>
    %119 = vector.shape_cast %118 : vector<1x8x128xf32> to vector<8x128xf32>
    %120 = vector.shape_cast %117 : vector<8x128xf32> to vector<1x8x128xf32>
    tpu.vector_store %arg7[%c6_56, %c0_57, %c0_58], %120 {strides = array<i32>} : memref<7x8x128xf32, #tpu.memory_space<vmem>>, vector<1x8x128xf32>,
    return
  }
  func.func @transform_0(%arg0: i32, %arg1: i32) -> (i32, i32) {
    %c1_i32 = arith.constant 1 : i32
    %0 = arith.muli %arg0, %c1_i32 : i32
    %1 = arith.addi %0, %arg1 : i32
    %c0_i32 = arith.constant 0 : i32
    %c0_i32_0 = arith.constant 0 : i32
    return %1, %c0_i32 : i32, i32
  }
  func.func @transform_1(%arg0: i32, %arg1: i32) -> (i32, i32) {
    %c1_i32 = arith.constant 1 : i32
    %0 = arith.muli %arg0, %c1_i32 : i32
    %1 = arith.addi %0, %arg1 : i32
    %c0_i32 = arith.constant 0 : i32
    %c0_i32_0 = arith.constant 0 : i32
    return %1, %c0_i32 : i32, i32
  }
  func.func @transform_2(%arg0: i32, %arg1: i32) -> (i32, i32, i32) {
    %c1_i32 = arith.constant 1 : i32
    %0 = arith.muli %arg0, %c1_i32 : i32
    %1 = arith.addi %0, %arg1 : i32
    %c0_i32 = arith.constant 0 : i32
    %c0_i32_0 = arith.constant 0 : i32
    %c0_i32_1 = arith.constant 0 : i32
    return %c0_i32, %1, %c0_i32_0 : i32, i32, i32
  }
  func.func @transform_3(%arg0: i32, %arg1: i32) -> (i32, i32, i32) {
    %c1_i32 = arith.constant 1 : i32
    %0 = arith.muli %arg0, %c1_i32 : i32
    %1 = arith.addi %0, %arg1 : i32
    %c0_i32 = arith.constant 0 : i32
    %c0_i32_0 = arith.constant 0 : i32
    %c0_i32_1 = arith.constant 0 : i32
    return %c0_i32, %1, %c0_i32_0 : i32, i32, i32
  }
  func.func @transform_4(%arg0: i32, %arg1: i32) -> (i32, i32) {
    %c1_i32 = arith.constant 1 : i32
    %0 = arith.muli %arg0, %c1_i32 : i32
    %1 = arith.addi %0, %arg1 : i32
    %c0_i32 = arith.constant 0 : i32
    %c0_i32_0 = arith.constant 0 : i32
    return %1, %c0_i32 : i32, i32
  }
  func.func @transform_5(%arg0: i32, %arg1: i32) -> (i32, i32, i32) {
    %c0_i32 = arith.constant 0 : i32
    %c0_i32_0 = arith.constant 0 : i32
    %c0_i32_1 = arith.constant 0 : i32
    return %arg0, %c0_i32, %c0_i32_0 : i32, i32, i32
  }
}

</mosaic_0001>

<llo_original>
// kernel: detection_loss.1
$region0: #{detection_loss.1}
  #allocation0 [shape = 'u32[]', space=smem, size = 0x4, offset = 0x4, fixed_abs, tag = 'smem constant byte address 0x4 - core index']
  #allocation1 [shape = 'u32[144,128]{1,0:T(1,128)}', space=vmem, size = 0x12000, scoped, tag = 'internal scratch']
  %s0 = inlined_call_operand.vmem [shape: bf16[8,128], index: 0, kind: input, shape index: {}]
  %s1 = inlined_call_operand.vmem [shape: bf16[8,128], index: 1, kind: input, shape index: {}]
  %s2 = inlined_call_operand.vmem [shape: bf16[5,8,128], index: 2, kind: input, shape index: {}]
  %s3 = inlined_call_operand.vmem [shape: bf16[5,8,128], index: 3, kind: input, shape index: {}]
  %s4 = inlined_call_operand.vmem [shape: bf16[8,128], index: 4, kind: input, shape index: {}]
  %s5 = inlined_call_operand.vmem [shape: f32[7,8,128], index: 5, kind: output, shape index: {}]
  %s6 = sld [smem:[#allocation0]]
  $region34: #{detection_loss.1} parent=0
    _
  %s8 = ssub.s32 1, %s6
  %s9 = scalar_select 0, %s8, %s6
  // Predicated region
  $region2: #{detection_loss.1} parent=0 // pred_check
    _
  $region3: #{detection_loss.1} parent=0 // pred_check_branch
    %11 = sbr.rel (0) target = $region5
  $region4: #{detection_loss.1} parent=0 // pred_region
    %s12 = sadd.s32 0, 0
    %p13 = scmp.lt.s32.totalorder %s12, 0
    %s14 = scalar_select %p13, %s12, 0
    %s15 = smul.addr %s14, 4
    %s16 = scalar_lea.vmem %s0, %s15
    %s17 = sadd.s32 0, 0
  $region5: #{detection_loss.1} parent=0 // pred_fallthru
    _
  // Predicated region
  $region6: #{detection_loss.1} parent=0 // pred_check
    _
  $region7: #{detection_loss.1} parent=0 // pred_check_branch
    %19 = sbr.rel (0) target = $region9
  $region8: #{detection_loss.1} parent=0 // pred_region
    %s20 = sadd.s32 0, 0
    %p21 = scmp.lt.s32.totalorder %s20, 0
    %s22 = scalar_select %p21, %s20, 0
    %s23 = smul.addr %s22, 4
    %s24 = scalar_lea.vmem %s1, %s23
    %s25 = sadd.s32 0, 0
  $region9: #{detection_loss.1} parent=0 // pred_fallthru
    _
  // Predicated region
  $region10: #{detection_loss.1} parent=0 // pred_check
    _
  $region11: #{detection_loss.1} parent=0 // pred_check_branch
    %27 = sbr.rel (0) target = $region13
  $region12: #{detection_loss.1} parent=0 // pred_region
    %s28 = sadd.s32 0, 0
    %p29 = scmp.lt.s32.totalorder %s28, 0
    %s30 = scalar_select %p29, %s28, 0
    %s31 = smul.addr %s30, 4
    %s32 = scalar_lea.vmem %s2, %s31
    %s33 = sadd.s32 0, 0
  $region13: #{detection_loss.1} parent=0 // pred_fallthru
    _
  // Predicated region
  $region14: #{detection_loss.1} parent=0 // pred_check
    _
  $region15: #{detection_loss.1} parent=0 // pred_check_branch
    %35 = sbr.rel (0) target = $region17
  $region16: #{detection_loss.1} parent=0 // pred_region
    %s36 = sadd.s32 0, 0
    %p37 = scmp.lt.s32.totalorder %s36, 0
    %s38 = scalar_select %p37, %s36, 0
    %s39 = smul.addr %s38, 4
    %s40 = scalar_lea.vmem %s3, %s39
    %s41 = sadd.s32 0, 0
  $region17: #{detection_loss.1} parent=0 // pred_fallthru
    _
  // Predicated region
  $region18: #{detection_loss.1} parent=0 // pred_check
    _
  $region19: #{detection_loss.1} parent=0 // pred_check_branch
    %43 = sbr.rel (0) target = $region21
  $region20: #{detection_loss.1} parent=0 // pred_region
    %s44 = sadd.s32 0, 0
    %p45 = scmp.lt.s32.totalorder %s44, 0
    %s46 = scalar_select %p45, %s44, 0
    %s47 = smul.addr %s46, 4
    %s48 = scalar_lea.vmem %s4, %s47
    %s49 = sadd.s32 0, 0
  $region21: #{detection_loss.1} parent=0 // pred_fallthru
    _
  %s50 = sadd.s32 0, 0
  %p51 = scmp.lt.s32.totalorder %s50, 0
  %s52 = scalar_select %p51, %s50, 0
  %s53 = smul.addr %s52, 4
  %s54 = scalar_lea.vmem %s0, %s53
  %s55 = sadd.s32 0, 0
  %p56 = scmp.lt.s32.totalorder %s55, 0
  %s57 = scalar_select %p56, %s55, 0
  %s58 = smul.addr %s57, 4
  %s59 = scalar_lea.vmem %s1, %s58
  %s60 = sadd.s32 0, 0
  %p61 = scmp.lt.s32.totalorder %s60, 0
  %s62 = scalar_select %p61, %s60, 0
  %s63 = smul.addr %s62, 4
  %s64 = scalar_lea.vmem %s2, %s63
  %s65 = sadd.s32 0, 0
  %p66 = scmp.lt.s32.totalorder %s65, 0
  %s67 = scalar_select %p66, %s65, 0
  %s68 = smul.addr %s67, 4
  %s69 = scalar_lea.vmem %s3, %s68
  %s70 = sadd.s32 0, 0
  %p71 = scmp.lt.s32.totalorder %s70, 0
  %s72 = scalar_select %p71, %s70, 0
  %s73 = smul.addr %s72, 4
  %s74 = scalar_lea.vmem %s4, %s73
  %s75 = sadd.s32 0, 0
  %p76 = scmp.lt.s32.totalorder %s75, 0
  %s77 = scalar_select %p76, %s75, 0
  %s78 = smul.addr %s77, 4
  %s79 = scalar_lea.vmem %s0, %s78
  %s80 = sadd.s32 0, 0
  %s81 = sadd.s32 0, 0
  %p82 = scmp.lt.s32.totalorder %s81, 0
  %s83 = scalar_select %p82, %s81, 0
  %s84 = smul.addr %s83, 4
  %s85 = scalar_lea.vmem %s1, %s84
  %s86 = sadd.s32 0, 0
  %s87 = sadd.s32 0, 0
  %p88 = scmp.lt.s32.totalorder %s87, 0
  %s89 = scalar_select %p88, %s87, 0
  %s90 = smul.addr %s89, 4
  %s91 = scalar_lea.vmem %s2, %s90
  %s92 = sadd.s32 0, 0
  %s93 = sadd.s32 0, 0
  %p94 = scmp.lt.s32.totalorder %s93, 0
  %s95 = scalar_select %p94, %s93, 0
  %s96 = smul.addr %s95, 4
  %s97 = scalar_lea.vmem %s3, %s96
  %s98 = sadd.s32 0, 0
  %s99 = sadd.s32 0, 0
  %p100 = scmp.lt.s32.totalorder %s99, 0
  %s101 = scalar_select %p100, %s99, 0
  %s102 = smul.addr %s101, 4
  %s103 = scalar_lea.vmem %s4, %s102
  %s104 = sadd.s32 0, 0
  %p105 = scmp.eq.s32.totalorder 0, 0
  // Predicated region
  $region22: #{detection_loss.1} parent=0 // pred_check
    %p106 = pneg %p105
  $region23: #{detection_loss.1} parent=0 // pred_check_branch
    %108 = sbr.rel (%p106) target = $region25
  $region24: #{detection_loss.1} parent=0 // pred_region
    %109 = vst [vmem:[%s5] sm:$0xff] 0.0
    %110 = vst [vmem:[%s5 + $0x8] sm:$0xff] 0.0
    %111 = vst [vmem:[%s5 + $0x10] sm:$0xff] 0.0
    %112 = vst [vmem:[%s5 + $0x18] sm:$0xff] 0.0
    %113 = vst [vmem:[%s5 + $0x20] sm:$0xff] 0.0
    %114 = vst [vmem:[%s5 + $0x28] sm:$0xff] 0.0
    %115 = vst [vmem:[%s5 + $0x30] sm:$0xff] 0.0
  $region25: #{detection_loss.1} parent=0 // pred_fallthru
    _
  %v116 = vld [vmem:[%s79] sm:$0xf]
  %v117 = vunpack.c.l.bf16 %v116
  %v118 = vld [vmem:[%s85] sm:$0xf]
  %v119 = vunpack.c.l.bf16 %v118
  %v120 = vld [vmem:[%s103] sm:$0xf]
  %v121 = vunpack.c.l.bf16 %v120
  %v122 = vsub.f32 1.0, %v121
  %v123 = vmul.f32 %v119, %v122
  %v124 = vld [vmem:[%s91] sm:$0xf]
  %v125 = vld [vmem:[%s91 + $0x4] sm:$0xf]
  %v126 = vld [vmem:[%s91 + $0x8] sm:$0xf]
  %v127 = vld [vmem:[%s91 + $0xc] sm:$0xf]
  %v128 = vld [vmem:[%s91 + $0x10] sm:$0xf]
  %v129 = vunpack.c.l.bf16 %v124
  %v130 = vunpack.c.l.bf16 %v125
  %v131 = vunpack.c.l.bf16 %v126
  %v132 = vunpack.c.l.bf16 %v127
  %v133 = vunpack.c.l.bf16 %v128
  %v134 = vld [vmem:[%s97] sm:$0xf]
  %v135 = vld [vmem:[%s97 + $0x4] sm:$0xf]
  %v136 = vld [vmem:[%s97 + $0x8] sm:$0xf]
  %v137 = vld [vmem:[%s97 + $0xc] sm:$0xf]
  %v138 = vld [vmem:[%s97 + $0x10] sm:$0xf]
  %v139 = vunpack.c.l.bf16 %v134
  %v140 = vunpack.c.l.bf16 %v135
  %v141 = vunpack.c.l.bf16 %v136
  %v142 = vunpack.c.l.bf16 %v137
  %v143 = vunpack.c.l.bf16 %v138
  %v144 = vadd.f32 %v129, %v130
  %v145 = vadd.f32 %v131, %v132
  %v146 = vmul.f32 %v144, %v145
  %v147 = vadd.f32 %v139, %v140
  %v148 = vadd.f32 %v141, %v142
  %v149 = vmul.f32 %v147, %v148
  %v150 = vmin.f32 %v131, %v141
  %v151 = vmin.f32 %v132, %v142
  %v152 = vadd.f32 %v150, %v151
  %v153 = vmin.f32 %v129, %v139
  %v154 = vmin.f32 %v130, %v140
  %v155 = vadd.f32 %v153, %v154
  %v156 = vmul.f32 %v152, %v155
  %v157 = vadd.f32 %v146, %v149
  %v158 = vsub.f32 %v157, %v156
  %v159 = vadd.f32 %v156, 1.0
  %v160 = vadd.f32 %v158, 1.0
  %v161 = vrcp.pop %v160
  %v162 = vmul.f32 %v159, %v161
  %v163 = vlog2.pop %v162
  %v164 = vmul.f32 %v163, 0.6931472
  %v165 = vsub.f32 0.0, %v164
  %v166 = vsub.f32 %v143, %v133
  %v167 = vand.u32 2147483647, %v166
  %vm168 = vcmp.le.f32.partialorder %v167, 0.7853982
  %vm169 = vcmp.lt.s32.totalorder %v166, 0
  %v170 = vand.u32 %v166, 2139095040
  %v171 = vshrl.u32 %v170, 23
  %v172 = vsub.s32 %v171, 127
  %v173 = vand.u32 2147483647, %v166
  %v174 = vand.u32 %v173, 8388607
  %v175 = vor.u32 %v174, 8388608
  %v176 = vsub.s32 0, %v175
  %v177 = vadd.s32 %v172, 1
  %vm178 = vcmp.gt.s32.totalorder %v177, 0
  %v179 = vsel %vm178, %v177, 0
  %v180 = vshrl.u32 %v179, 5
  %v181 = vand.u32 %v179, 31
  %v182 = vsub.s32 32, %v181
  %v183 = vshrl.u32 683565275, %v182
  %v184 = vshll.u32 683565275, %v181
  %v185 = vshrl.u32 2475754826, %v182
  %v186 = vor.u32 %v184, %v185
  %v187 = vshll.u32 2475754826, %v181
  %v188 = vshrl.u32 2131351028, %v182
  %v189 = vor.u32 %v187, %v188
  %v190 = vshll.u32 2131351028, %v181
  %v191 = vshrl.u32 2102212464, %v182
  %v192 = vor.u32 %v190, %v191
  %v193 = vshll.u32 2102212464, %v181
  %v194 = vshrl.u32 920167782, %v182
  %v195 = vor.u32 %v193, %v194
  %v196 = vshll.u32 920167782, %v181
  %v197 = vshrl.u32 1326507024, %v182
  %v198 = vor.u32 %v196, %v197
  %vm199 = vcmp.lt.s32.totalorder %v180, 1
  %vm200 = vcmp.lt.s32.totalorder %v180, 2
  %vm201 = vcmp.lt.s32.totalorder %v180, 3
  %vm202 = vcmp.lt.s32.totalorder %v180, 4
  %v203 = vsel %vm199, %v183, %v186
  %v204 = vsel %vm202, %v192, 2102212464
  %v205 = vsel %vm201, %v189, %v204
  %v206 = vsel %vm200, %v203, %v205
  %v207 = vsel %vm199, %v186, %v189
  %v208 = vsel %vm202, %v195, 920167782
  %v209 = vsel %vm201, %v192, %v208
  %v210 = vsel %vm200, %v207, %v209
  %v211 = vsel %vm199, %v189, %v192
  %v212 = vsel %vm202, %v198, 1326507024
  %v213 = vsel %vm201, %v195, %v212
  %v214 = vsel %vm200, %v211, %v213
  %v215 = vshll.u32 %v175, 8
  %v216 = vmul.u32.u64.compose %v215, %v214
  %v217 = vextract.low.u32 %v216
  %v218 = vextract.high.u32 %v216
  %v219 = vmul.u32.u64.compose %v215, %v210
  %v220 = vextract.low.u32 %v219
  %v221 = vextract.high.u32 %v219
  %v222 = vmul.u32 %v215, %v206
  %v223 = vadd.s32 %v218, %v220
  %vm224 = vc.u32 %v218, %v220
  %v225 = vadd.s32 %v221, 1
  %v226 = vsel %vm224, %v225, %v221
  %v227 = vadd.s32 %v222, %v226
  %v228 = vadd.s32 %v227, 536870912
  %v229 = vshrl.u32 %v228, 30
  %v230 = vshll.u32 %v229, 30
  %v231 = vsub.s32 %v227, %v230
  %vm232 = vcmp.lt.s32.totalorder %v231, 0
  %v233 = vsub.s32 0, %v231
  %v234 = vsel %vm232, %v233, %v231
  %v235 = vclz %v234
  %v236 = vsub.s32 %v235, 2
  %vm237 = vcmp.gt.s32.totalorder 0, %v236
  %v238 = vsel %vm237, 0, %v236
  %v239 = vsub.s32 32, %v238
  %v240 = vshll.u32 %v231, %v238
  %v241 = vshrl.u32 %v223, %v239
  %v242 = vor.u32 %v240, %v241
  %v243 = vsub.s32 4294967266, %v238
  %v244 = vadd.s32 %v243, 127
  %v245 = vshll.u32 %v244, 23
  %v246 = vor.u32 4788187, %v245
  %v247 = vand.u32 2147483647, %v246
  %v249 = vcvt.s32.f32 %v242
  %v250 = vmul.f32 %v249, %v247
  %v251 = vxor.u32 %v250, 2147483648
  %v252 = vsel %vm169, %v251, %v250
  %v253 = vsub.s32 4, %v229
  %v254 = vsel %vm169, %v253, %v229
  %v255 = vsel %vm168, %v166, %v252
  %v256 = vsel %vm168, 0, %v254
  %v257 = vcosq.f32.pop %v255
  %v258 = vsinq.f32.pop %v255
  %vm259 = vweird.f32 %v166
  %v260 = vand.u32 %v256, 3
  %vm261 = vcmp.lt.s32.totalorder %v260, 2
  %vm262 = vcmp.eq.s32.totalorder %v260, 0
  %v263 = vxor.u32 %v258, 2147483648
  %v264 = vsel %vm262, %v257, %v263
  %vm265 = vcmp.eq.s32.totalorder %v260, 2
  %v266 = vxor.u32 %v257, 2147483648
  %v267 = vsel %vm265, %v266, %v258
  %v268 = vsel %vm261, %v264, %v267
  %v269 = vsel %vm259, nan, %v268
  %v270 = vsub.f32 1.0, %v269
  %v271 = vld [vmem:[%s5] sm:$0xff]
  %v272 = vadd.f32 %v117, 0.0
  %v273 = vadd.f32 %v271, %v272
  %274 = vst [vmem:[%s5] sm:$0xff] %v273
  %s275 = scalar_lea.vmem %s5, 8
  %v276 = vld [vmem:[%s275] sm:$0xff]
  %v277 = vadd.f32 %v123, 0.0
  %v278 = vadd.f32 %v276, %v277
  %279 = vst [vmem:[%s275] sm:$0xff] %v278
  %s280 = scalar_lea.vmem %s5, 16
  %v281 = vld [vmem:[%s280] sm:$0xff]
  %v282 = vmul.f32 %v117, %v123
  %v283 = vadd.f32 %v282, 0.0
  %v284 = vadd.f32 %v281, %v283
  %285 = vst [vmem:[%s280] sm:$0xff] %v284
  %s286 = scalar_lea.vmem %s5, 24
  %v287 = vld [vmem:[%s286] sm:$0xff]
  %v288 = vmul.f32 %v270, %v117
  %v289 = vadd.f32 %v288, 0.0
  %v290 = vadd.f32 %v287, %v289
  %291 = vst [vmem:[%s286] sm:$0xff] %v290
  %s292 = scalar_lea.vmem %s5, 32
  %v293 = vld [vmem:[%s292] sm:$0xff]
  %v294 = vmul.f32 %v165, %v117
  %v295 = vadd.f32 %v294, 0.0
  %v296 = vadd.f32 %v293, %v295
  %297 = vst [vmem:[%s292] sm:$0xff] %v296
  %s298 = scalar_lea.vmem %s5, 40
  %v299 = vld [vmem:[%s298] sm:$0xff]
  %v300 = vadd.f32 %v119, 0.0
  %v301 = vadd.f32 %v299, %v300
  %302 = vst [vmem:[%s298] sm:$0xff] %v301
  %s303 = scalar_lea.vmem %s5, 48
  %v304 = vld [vmem:[%s303] sm:$0xff]
  %v305 = vadd.f32 %v147, %v141
  %v306 = vadd.f32 %v305, %v142
  %v307 = vadd.f32 %v306, %v143
  %v308 = vadd.f32 %v304, %v307
  %309 = vst [vmem:[%s303] sm:$0xff] %v308
  // Predicated region
  $region26: #{detection_loss.1} parent=0 // pred_check
    _
  $region27: #{detection_loss.1} parent=0 // pred_check_branch
    %311 = sbr.rel (0) target = $region29
  $region28: #{detection_loss.1} parent=0 // pred_region
    _
  $region29: #{detection_loss.1} parent=0 // pred_fallthru
    _
  // Predicated region
  $region30: #{detection_loss.1} parent=0 // pred_check
    _
  $region31: #{detection_loss.1} parent=0 // pred_check_branch
    %313 = sbr.rel (0) target = $region33
  $region32: #{detection_loss.1} parent=0 // pred_region
    _
  $region33: #{detection_loss.1} parent=0 // pred_fallthru
    _

</llo_original>
